<compile_context>
chip_gen: v7x
topology: tpu7x:2x2x1
jax: 0.10.0
libtpu: 0.0.40
codegen_flags: <defaults>
</compile_context>

<pallas_src>
import math

import jax
import jax.numpy as jnp
from jax.experimental import pallas as pl
from jax.experimental.pallas import tpu as pltpu

# FocalLoss hyper-params
F_ALPHA = 0.25
F_GAMMA = 2.0          # NOTE: hard-coded as (1-pt)^2 inside the kernel.
# FocalTverskyLoss hyper-params
T_ALPHA = 0.3
T_BETA = 0.7
T_GAMMA = 0.75
SMOOTH = 1e-5

# Focal-loss value of a zero-padded element (x=0, t=0); used to compensate the
# focal sum when the lane axis is padded to a multiple of 128.
_FL_PAD = (1.0 - F_ALPHA) * 0.25 * math.log(2.0)

_VMEM_INPUT_BUDGET = 24 * 1024 * 1024   # budget for double-buffered input tiles
_VMEM_LIMIT = 40 * 1024 * 1024          # scoped VMEM limit (safe on v5e/v6e/v7x)


def _hybrid_partial_kernel(x_ref, t_ref, fl_out, x_out, t_out, xt_out):
    """One (rows, tile) slab: elementwise focal loss + per-row partial sums."""
    step = pl.program_id(1)

    x = x_ref[...].astype(jnp.float32)     # logits
    t = t_ref[...].astype(jnp.float32)     # targets
    xt = x * t

    # ---- EUP-lean focal-loss hot path (1 exp, 1 log, 1 approx recip) ------
    e = jnp.exp(-jnp.abs(x))               # exp(-|x|) in (0, 1]
    one_p_e = 1.0 + e
    inv = pl.reciprocal(one_p_e, approx=True)
    inv = inv * (2.0 - one_p_e * inv)      # one Newton step -> ~f32 accuracy
    log_term = jnp.log(one_p_e)
    p = jnp.where(x >= 0.0, inv, e * inv)            # sigmoid(x)
    bce = jnp.maximum(x, 0.0) - xt + log_term        # stable BCE-with-logits
    one_m_pt = p + t - 2.0 * p * t                   # 1 - pt
    alpha_t = (1.0 - F_ALPHA) - (1.0 - 2.0 * F_ALPHA) * t
    fl = alpha_t * (one_m_pt * one_m_pt) * bce       # gamma == 2

    # ---- per-step lane reduction into narrow (rows, 1) output accumulators
    fl_p = jnp.sum(fl, axis=1, keepdims=True)
    x_p = jnp.sum(x, axis=1, keepdims=True)
    t_p = jnp.sum(t, axis=1, keepdims=True)
    xt_p = jnp.sum(xt, axis=1, keepdims=True)

    @pl.when(step == 0)
    def _():
        fl_out[...] = fl_p
        x_out[...] = x_p
        t_out[...] = t_p
        xt_out[...] = xt_p

    @pl.when(step > 0)
    def _():
        fl_out[...] += fl_p
        x_out[...] += x_p
        t_out[...] += t_p
        xt_out[...] += xt_p


def hybrid_focal_loss(inputs, targets, lmbda, *, tile_m=16384, num_slices=1):
    """inputs, targets: NCHW float arrays (f32 or bf16). Returns scalar f32."""
    N, C, H, W = inputs.shape
    NC, M = N * C, H * W
    numel = float(N * C * H * W)
    lmbda = float(lmbda)

    itemsize = max(inputs.dtype.itemsize, targets.dtype.itemsize)
    min_rows = 8 if itemsize >= 4 else 16            # sublane pack (f32 / bf16)

    # ---- layout: fold spatial into rows when NC underfills the sublanes ----
    fold = 1
    if NC < min_rows:
        for k in range(2, min(M, 4096) + 1):
            if M % k == 0 and NC * k >= min_rows:
                fold = k
                break
    rows = NC * fold
    cols = M // fold

    # NCHW -> (rows, cols): merges contiguous axes, no data movement.
    x2 = inputs.reshape(rows, cols)
    t2 = targets.reshape(rows, cols)

    # ---- pad lane axis to a multiple of 128 (zero pad, compensated below) --
    pad_cols = (-cols) % 128
    if pad_cols:
        x2 = jnp.pad(x2, ((0, 0), (0, pad_cols)))
        t2 = jnp.pad(t2, ((0, 0), (0, pad_cols)))
    cols_p = cols + pad_cols
    pad_total = rows * pad_cols

    # ---- grid: (P slices) x (steps) -----------------------------------------
    P = num_slices if (num_slices > 1 and (cols_p // 128) % num_slices == 0) else 1
    slice_cols = cols_p // P

    per_col_bytes = rows * 2 * 2 * itemsize          # 2 inputs x 2 pipeline bufs
    cap = max(128, (_VMEM_INPUT_BUDGET // per_col_bytes) // 128 * 128)
    tile = max(128, (min(tile_m, slice_cols, cap) // 128) * 128)
    while slice_cols % tile != 0:                    # terminates: slice_cols%128==0
        tile -= 128
    steps = slice_cols // tile

    in_spec = pl.BlockSpec((rows, tile), lambda p, s: (0, p * steps + s))
    out_specs = [pl.BlockSpec((None, rows, 1), lambda p, s: (p, 0, 0))
                 for _ in range(4)]
    out_shapes = tuple(jax.ShapeDtypeStruct((P, rows, 1), jnp.float32)
                       for _ in range(4))

    fl_p, x_p, t_p, xt_p = pl.pallas_call(
        _hybrid_partial_kernel,
        out_shape=out_shapes,
        grid_spec=pltpu.PrefetchScalarGridSpec(
            num_scalar_prefetch=0,
            grid=(P, steps),
            in_specs=[in_spec, in_spec],
            out_specs=out_specs),
        compiler_params=pltpu.CompilerParams(
            dimension_semantics=("parallel", "arbitrary"),
            vmem_limit_bytes=_VMEM_LIMIT),
    )(x2, t2)

    # ---- tiny finalize (Tversky + combine) in plain JAX ---------------------
    fl_sum = jnp.sum(fl_p)
    if pad_total:
        fl_sum = fl_sum - pad_total * _FL_PAD        # undo zero-pad contribution
    x_sum = jnp.sum(x_p)
    t_sum = jnp.sum(t_p)
    # Rows are ordered (n, c, fold) so the per-channel tp is recovered exactly.
    tp = jnp.sum(xt_p, axis=0).reshape(N, C, fold).sum(axis=(0, 2))

    focal = fl_sum / numel
    fp = x_sum - tp
    fn = t_sum - tp
    tversky = (2.0 * tp + SMOOTH) / (
        2.0 * tp + T_ALPHA * fp + T_BETA * fn + SMOOTH)
    # Matches reference (1 - tversky) ** 0.75 (NaN for tversky > 1, like torch).
    ft = jnp.mean((1.0 - tversky) ** T_GAMMA)
    return lmbda * focal + (1.0 - lmbda) * ft


def _reference_hybrid_focal_loss(x, t, lmbda):
    """Pure-JAX reference mirroring the PyTorch module exactly."""
    x = x.astype(jnp.float32)
    t = t.astype(jnp.float32)
    bce = jnp.maximum(x, 0.0) - x * t + jnp.log(1.0 + jnp.exp(-jnp.abs(x)))
    p = jax.nn.sigmoid(x)
    pt = p * t + (1.0 - p) * (1.0 - t)
    fl = (1.0 - pt) ** F_GAMMA * bce
    alpha_t = F_ALPHA * t + (1.0 - F_ALPHA) * (1.0 - t)
    focal = jnp.mean(alpha_t * fl)
    tp = jnp.sum(x * t, axis=(0, 2, 3))
    fp = jnp.sum(x) - tp
    fn = jnp.sum(t) - tp
    tversky = (2.0 * tp + SMOOTH) / (2.0 * tp + T_ALPHA * fp + T_BETA * fn + SMOOTH)
    ft = jnp.mean((1.0 - tversky) ** T_GAMMA)
    return lmbda * focal + (1.0 - lmbda) * ft


if __name__ == "__main__":
    LMBDA = 0.5  # HybridFocalLoss(lmbda=0.5)

    def make_case(key, shape):
        k_x, k_t = jax.random.split(key)
        # "logits" in (0, 1) keep the (unusual but faithful) Tversky-on-logits
        # term positive, matching typical usage of this loss.
        x = jax.random.uniform(k_x, shape, jnp.float32, minval=0.05, maxval=0.95)
        t = jax.random.bernoulli(k_t, 0.5, shape).astype(jnp.float32)
        return x, t

    k1, k2, k3 = jax.random.split(jax.random.PRNGKey(0), 3)

    # Case 1: spec shape (lane axis already a multiple of 128).
    x, t = make_case(k1, (2, 4, 16, 16))
    out = jax.block_until_ready(hybrid_focal_loss(x, t, LMBDA))
    ref = _reference_hybrid_focal_loss(x, t, LMBDA)
    assert jnp.allclose(out, ref, rtol=1e-4, atol=1e-6), (out, ref)

    # Case 2: unaligned spatial size + NC below the sublane pack (fold + pad).
    x, t = make_case(k2, (1, 2, 10, 12))
    out = jax.block_until_ready(hybrid_focal_loss(x, t, LMBDA))
    ref = _reference_hybrid_focal_loss(x, t, LMBDA)
    assert jnp.allclose(out, ref, rtol=1e-4, atol=1e-6), (out, ref)

    # Case 3: multi-step streaming + two parallel slices (accumulator path).
    x, t = make_case(k3, (2, 4, 64, 64))
    out = jax.block_until_ready(
        hybrid_focal_loss(x, t, LMBDA, tile_m=512, num_slices=2))
    ref = _reference_hybrid_focal_loss(x, t, LMBDA)
    assert jnp.allclose(out, ref, rtol=1e-4, atol=1e-6), (out, ref)

    print("KERNEL_OK")
</pallas_src>

<mosaic_0001>
module attributes {stable_mosaic.version = 11 : i64} {
  func.func @_hybrid_partial_kernel(%arg0: i32, %arg1: i32, %arg2: memref<8x256xf32, #tpu.memory_space<vmem>>, %arg3: memref<8x256xf32, #tpu.memory_space<vmem>>, %arg4: memref<1x8x1xf32, #tpu.memory_space<vmem>>, %arg5: memref<1x8x1xf32, #tpu.memory_space<vmem>>, %arg6: memref<1x8x1xf32, #tpu.memory_space<vmem>>, %arg7: memref<1x8x1xf32, #tpu.memory_space<vmem>>) attributes {dimension_semantics = [#tpu.dimension_semantics<parallel>, #tpu.dimension_semantics<arbitrary>], iteration_bounds = array<i64: 1, 1>, scalar_prefetch = 0 : i64, scratch_operands = 0 : i64, tpu.core_type = #tpu.core_type<tc>, window_params = [{transform_indices = @transform_0, window_bounds = array<i64: 8, 256>}, {transform_indices = @transform_1, window_bounds = array<i64: 8, 256>}, {transform_indices = @transform_2, window_bounds = array<i64: 1, 8, 1>}, {transform_indices = @transform_3, window_bounds = array<i64: 1, 8, 1>}, {transform_indices = @transform_4, window_bounds = array<i64: 1, 8, 1>}, {transform_indices = @transform_5, window_bounds = array<i64: 1, 8, 1>}]} {
    %c0 = arith.constant 0 : index
    %c0_0 = arith.constant 0 : index
    %0 = vector.load %arg2[%c0, %c0_0] : memref<8x256xf32, #tpu.memory_space<vmem>>, vector<8x256xf32>
    %c0_1 = arith.constant 0 : index
    %c0_2 = arith.constant 0 : index
    %1 = vector.load %arg3[%c0_1, %c0_2] : memref<8x256xf32, #tpu.memory_space<vmem>>, vector<8x256xf32>
    %2 = arith.mulf %0, %1 : vector<8x256xf32>
    %3 = math.absf %0 : vector<8x256xf32>
    %cst = arith.constant 0.000000e+00 : f32
    %4 = vector.broadcast %cst : f32 to vector<8x256xf32>
    %5 = arith.subf %4, %3 : vector<8x256xf32>
    %6 = math.exp %5 : vector<8x256xf32>
    %cst_3 = arith.constant 1.000000e+00 : f32
    %7 = vector.broadcast %cst_3 : f32 to vector<8x256xf32>
    %8 = arith.addf %7, %6 : vector<8x256xf32>
    %9 = tpu.reciprocal %8 {approx = true} : vector<8x256xf32> -> vector<8x256xf32>
    %10 = arith.mulf %8, %9 : vector<8x256xf32>
    %cst_4 = arith.constant 2.000000e+00 : f32
    %11 = vector.broadcast %cst_4 : f32 to vector<8x256xf32>
    %12 = arith.subf %11, %10 : vector<8x256xf32>
    %13 = arith.mulf %9, %12 : vector<8x256xf32>
    %14 = math.log %8 : vector<8x256xf32>
    %cst_5 = arith.constant 0.000000e+00 : f32
    %15 = vector.broadcast %cst_5 : f32 to vector<8x256xf32>
    %16 = arith.cmpf oge, %0, %15 : vector<8x256xf32>
    %17 = arith.mulf %6, %13 : vector<8x256xf32>
    %18 = arith.select %16, %13, %17 : vector<8x256xi1>, vector<8x256xf32>
    %cst_6 = arith.constant 0.000000e+00 : f32
    %19 = vector.broadcast %cst_6 : f32 to vector<8x256xf32>
    %20 = arith.maximumf %0, %19 : vector<8x256xf32>
    %21 = arith.subf %20, %2 : vector<8x256xf32>
    %22 = arith.addf %21, %14 : vector<8x256xf32>
    %23 = arith.addf %18, %1 : vector<8x256xf32>
    %cst_7 = arith.constant 2.000000e+00 : f32
    %24 = vector.broadcast %cst_7 : f32 to vector<8x256xf32>
    %25 = arith.mulf %24, %18 : vector<8x256xf32>
    %26 = arith.mulf %25, %1 : vector<8x256xf32>
    %27 = arith.subf %23, %26 : vector<8x256xf32>
    %cst_8 = arith.constant 5.000000e-01 : f32
    %28 = vector.broadcast %cst_8 : f32 to vector<8x256xf32>
    %29 = arith.mulf %28, %1 : vector<8x256xf32>
    %cst_9 = arith.constant 7.500000e-01 : f32
    %30 = vector.broadcast %cst_9 : f32 to vector<8x256xf32>
    %31 = arith.subf %30, %29 : vector<8x256xf32>
    %32 = arith.mulf %27, %27 : vector<8x256xf32>
    %33 = arith.mulf %31, %32 : vector<8x256xf32>
    %34 = arith.mulf %33, %22 : vector<8x256xf32>
    %cst_10 = arith.constant dense<0.000000e+00> : vector<8xf32>
    %35 = vector.multi_reduction <add>, %34, %cst_10 [1] : vector<8x256xf32> to vector<8xf32>
    %36 = vector.shape_cast %35 : vector<8xf32> to vector<8x1xf32>
    %cst_11 = arith.constant dense<0.000000e+00> : vector<8xf32>
    %37 = vector.multi_reduction <add>, %0, %cst_11 [1] : vector<8x256xf32> to vector<8xf32>
    %38 = vector.shape_cast %37 : vector<8xf32> to vector<8x1xf32>
    %cst_12 = arith.constant dense<0.000000e+00> : vector<8xf32>
    %39 = vector.multi_reduction <add>, %1, %cst_12 [1] : vector<8x256xf32> to vector<8xf32>
    %40 = vector.shape_cast %39 : vector<8xf32> to vector<8x1xf32>
    %cst_13 = arith.constant dense<0.000000e+00> : vector<8xf32>
    %41 = vector.multi_reduction <add>, %2, %cst_13 [1] : vector<8x256xf32> to vector<8xf32>
    %42 = vector.shape_cast %41 : vector<8xf32> to vector<8x1xf32>
    %c0_i32 = arith.constant 0 : i32
    %43 = arith.cmpi eq, %arg1, %c0_i32 : i32
    %44 = arith.extui %43 : i1 to i32
    %c0_i32_14 = arith.constant 0 : i32
    %45 = arith.cmpi ne, %44, %c0_i32_14 : i32
    scf.if %45 {
      %c0_17 = arith.constant 0 : index
      %c0_18 = arith.constant 0 : index
      %c0_19 = arith.constant 0 : index
      %49 = vector.load %arg4[%c0_17, %c0_18, %c0_19] : memref<1x8x1xf32, #tpu.memory_space<vmem>>, vector<1x8x1xf32>
      %50 = vector.shape_cast %49 : vector<1x8x1xf32> to vector<8x1xf32>
      %51 = vector.shape_cast %36 : vector<8x1xf32> to vector<1x8x1xf32>
      tpu.vector_store %arg4[%c0_17, %c0_18, %c0_19], %51 {strides = array<i32>} : memref<1x8x1xf32, #tpu.memory_space<vmem>>, vector<1x8x1xf32>,
      %c0_20 = arith.constant 0 : index
      %c0_21 = arith.constant 0 : index
      %c0_22 = arith.constant 0 : index
      %52 = vector.load %arg5[%c0_20, %c0_21, %c0_22] : memref<1x8x1xf32, #tpu.memory_space<vmem>>, vector<1x8x1xf32>
      %53 = vector.shape_cast %52 : vector<1x8x1xf32> to vector<8x1xf32>
      %54 = vector.shape_cast %38 : vector<8x1xf32> to vector<1x8x1xf32>
      tpu.vector_store %arg5[%c0_20, %c0_21, %c0_22], %54 {strides = array<i32>} : memref<1x8x1xf32, #tpu.memory_space<vmem>>, vector<1x8x1xf32>,
      %c0_23 = arith.constant 0 : index
      %c0_24 = arith.constant 0 : index
      %c0_25 = arith.constant 0 : index
      %55 = vector.load %arg6[%c0_23, %c0_24, %c0_25] : memref<1x8x1xf32, #tpu.memory_space<vmem>>, vector<1x8x1xf32>
      %56 = vector.shape_cast %55 : vector<1x8x1xf32> to vector<8x1xf32>
      %57 = vector.shape_cast %40 : vector<8x1xf32> to vector<1x8x1xf32>
      tpu.vector_store %arg6[%c0_23, %c0_24, %c0_25], %57 {strides = array<i32>} : memref<1x8x1xf32, #tpu.memory_space<vmem>>, vector<1x8x1xf32>,
      %c0_26 = arith.constant 0 : index
      %c0_27 = arith.constant 0 : index
      %c0_28 = arith.constant 0 : index
      %58 = vector.load %arg7[%c0_26, %c0_27, %c0_28] : memref<1x8x1xf32, #tpu.memory_space<vmem>>, vector<1x8x1xf32>
      %59 = vector.shape_cast %58 : vector<1x8x1xf32> to vector<8x1xf32>
      %60 = vector.shape_cast %42 : vector<8x1xf32> to vector<1x8x1xf32>
      tpu.vector_store %arg7[%c0_26, %c0_27, %c0_28], %60 {strides = array<i32>} : memref<1x8x1xf32, #tpu.memory_space<vmem>>, vector<1x8x1xf32>,
    } else {
    }
    %c0_i32_15 = arith.constant 0 : i32
    %46 = arith.cmpi sgt, %arg1, %c0_i32_15 : i32
    %47 = arith.extui %46 : i1 to i32
    %c0_i32_16 = arith.constant 0 : i32
    %48 = arith.cmpi ne, %47, %c0_i32_16 : i32
    scf.if %48 {
      %c0_17 = arith.constant 0 : index
      %c0_18 = arith.constant 0 : index
      %c0_19 = arith.constant 0 : index
      %49 = vector.load %arg4[%c0_17, %c0_18, %c0_19] : memref<1x8x1xf32, #tpu.memory_space<vmem>>, vector<1x8x1xf32>
      %50 = vector.shape_cast %49 : vector<1x8x1xf32> to vector<8x1xf32>
      %51 = arith.addf %50, %36 : vector<8x1xf32>
      %c0_20 = arith.constant 0 : index
      %c0_21 = arith.constant 0 : index
      %c0_22 = arith.constant 0 : index
      %52 = vector.load %arg4[%c0_20, %c0_21, %c0_22] : memref<1x8x1xf32, #tpu.memory_space<vmem>>, vector<1x8x1xf32>
      %53 = vector.shape_cast %52 : vector<1x8x1xf32> to vector<8x1xf32>
      %54 = vector.shape_cast %51 : vector<8x1xf32> to vector<1x8x1xf32>
      tpu.vector_store %arg4[%c0_20, %c0_21, %c0_22], %54 {strides = array<i32>} : memref<1x8x1xf32, #tpu.memory_space<vmem>>, vector<1x8x1xf32>,
      %c0_23 = arith.constant 0 : index
      %c0_24 = arith.constant 0 : index
      %c0_25 = arith.constant 0 : index
      %55 = vector.load %arg5[%c0_23, %c0_24, %c0_25] : memref<1x8x1xf32, #tpu.memory_space<vmem>>, vector<1x8x1xf32>
      %56 = vector.shape_cast %55 : vector<1x8x1xf32> to vector<8x1xf32>
      %57 = arith.addf %56, %38 : vector<8x1xf32>
      %c0_26 = arith.constant 0 : index
      %c0_27 = arith.constant 0 : index
      %c0_28 = arith.constant 0 : index
      %58 = vector.load %arg5[%c0_26, %c0_27, %c0_28] : memref<1x8x1xf32, #tpu.memory_space<vmem>>, vector<1x8x1xf32>
      %59 = vector.shape_cast %58 : vector<1x8x1xf32> to vector<8x1xf32>
      %60 = vector.shape_cast %57 : vector<8x1xf32> to vector<1x8x1xf32>
      tpu.vector_store %arg5[%c0_26, %c0_27, %c0_28], %60 {strides = array<i32>} : memref<1x8x1xf32, #tpu.memory_space<vmem>>, vector<1x8x1xf32>,
      %c0_29 = arith.constant 0 : index
      %c0_30 = arith.constant 0 : index
      %c0_31 = arith.constant 0 : index
      %61 = vector.load %arg6[%c0_29, %c0_30, %c0_31] : memref<1x8x1xf32, #tpu.memory_space<vmem>>, vector<1x8x1xf32>
      %62 = vector.shape_cast %61 : vector<1x8x1xf32> to vector<8x1xf32>
      %63 = arith.addf %62, %40 : vector<8x1xf32>
      %c0_32 = arith.constant 0 : index
      %c0_33 = arith.constant 0 : index
      %c0_34 = arith.constant 0 : index
      %64 = vector.load %arg6[%c0_32, %c0_33, %c0_34] : memref<1x8x1xf32, #tpu.memory_space<vmem>>, vector<1x8x1xf32>
      %65 = vector.shape_cast %64 : vector<1x8x1xf32> to vector<8x1xf32>
      %66 = vector.shape_cast %63 : vector<8x1xf32> to vector<1x8x1xf32>
      tpu.vector_store %arg6[%c0_32, %c0_33, %c0_34], %66 {strides = array<i32>} : memref<1x8x1xf32, #tpu.memory_space<vmem>>, vector<1x8x1xf32>,
      %c0_35 = arith.constant 0 : index
      %c0_36 = arith.constant 0 : index
      %c0_37 = arith.constant 0 : index
      %67 = vector.load %arg7[%c0_35, %c0_36, %c0_37] : memref<1x8x1xf32, #tpu.memory_space<vmem>>, vector<1x8x1xf32>
      %68 = vector.shape_cast %67 : vector<1x8x1xf32> to vector<8x1xf32>
      %69 = arith.addf %68, %42 : vector<8x1xf32>
      %c0_38 = arith.constant 0 : index
      %c0_39 = arith.constant 0 : index
      %c0_40 = arith.constant 0 : index
      %70 = vector.load %arg7[%c0_38, %c0_39, %c0_40] : memref<1x8x1xf32, #tpu.memory_space<vmem>>, vector<1x8x1xf32>
      %71 = vector.shape_cast %70 : vector<1x8x1xf32> to vector<8x1xf32>
      %72 = vector.shape_cast %69 : vector<8x1xf32> to vector<1x8x1xf32>
      tpu.vector_store %arg7[%c0_38, %c0_39, %c0_40], %72 {strides = array<i32>} : memref<1x8x1xf32, #tpu.memory_space<vmem>>, vector<1x8x1xf32>,
    } else {
    }
    return
  }
  func.func @transform_0(%arg0: i32, %arg1: i32) -> (i32, i32) {
    %c1_i32 = arith.constant 1 : i32
    %0 = arith.muli %arg0, %c1_i32 : i32
    %1 = arith.addi %0, %arg1 : i32
    %c0_i32 = arith.constant 0 : i32
    %c0_i32_0 = arith.constant 0 : i32
    return %c0_i32, %1 : i32, i32
  }
  func.func @transform_1(%arg0: i32, %arg1: i32) -> (i32, i32) {
    %c1_i32 = arith.constant 1 : i32
    %0 = arith.muli %arg0, %c1_i32 : i32
    %1 = arith.addi %0, %arg1 : i32
    %c0_i32 = arith.constant 0 : i32
    %c0_i32_0 = arith.constant 0 : i32
    return %c0_i32, %1 : i32, i32
  }
  func.func @transform_2(%arg0: i32, %arg1: i32) -> (i32, i32, i32) {
    %c0_i32 = arith.constant 0 : i32
    %c0_i32_0 = arith.constant 0 : i32
    %c0_i32_1 = arith.constant 0 : i32
    return %arg0, %c0_i32, %c0_i32_0 : i32, i32, i32
  }
  func.func @transform_3(%arg0: i32, %arg1: i32) -> (i32, i32, i32) {
    %c0_i32 = arith.constant 0 : i32
    %c0_i32_0 = arith.constant 0 : i32
    %c0_i32_1 = arith.constant 0 : i32
    return %arg0, %c0_i32, %c0_i32_0 : i32, i32, i32
  }
  func.func @transform_4(%arg0: i32, %arg1: i32) -> (i32, i32, i32) {
    %c0_i32 = arith.constant 0 : i32
    %c0_i32_0 = arith.constant 0 : i32
    %c0_i32_1 = arith.constant 0 : i32
    return %arg0, %c0_i32, %c0_i32_0 : i32, i32, i32
  }
  func.func @transform_5(%arg0: i32, %arg1: i32) -> (i32, i32, i32) {
    %c0_i32 = arith.constant 0 : i32
    %c0_i32_0 = arith.constant 0 : i32
    %c0_i32_1 = arith.constant 0 : i32
    return %arg0, %c0_i32, %c0_i32_0 : i32, i32, i32
  }
}

</mosaic_0001>

<llo_original>
// kernel: tpu_custom_call.1
$region0: #{tpu_custom_call.1}
  #allocation0 [shape = 'u32[]', space=smem, size = 0x4, offset = 0x4, fixed_abs, tag = 'smem constant byte address 0x4 - core index']
  #allocation1 [shape = 'u32[144,128]{1,0:T(1,128)}', space=vmem, size = 0x12000, scoped, tag = 'internal scratch']
  %s0 = inlined_call_operand.hbm [shape: f32[8,256], index: 0, kind: input, shape index: {}]
  %s1 = inlined_call_operand.hbm [shape: f32[8,256], index: 1, kind: input, shape index: {}]
  %s2 = inlined_call_operand.vmem [shape: f32[1,8,1], index: 2, kind: output, shape index: {0}]
  %s3 = inlined_call_operand.vmem [shape: f32[1,8,1], index: 3, kind: output, shape index: {1}]
  %s4 = inlined_call_operand.vmem [shape: f32[1,8,1], index: 4, kind: output, shape index: {2}]
  %s5 = inlined_call_operand.vmem [shape: f32[1,8,1], index: 5, kind: output, shape index: {3}]
  %6 = xla_tuple %s2, %s3, %s4, %s5
  %s7 = sld [smem:[#allocation0]]
  $region58: #{tpu_custom_call.1} parent=0
    _
  %s9 = ssub.s32 1, %s7
  %s10 = scalar_select 0, %s9, %s7
  $region1: #{tpu_custom_call.1} parent=0
    #allocation2 [shape = 'u8[8192]{0}', space=vmem, size = 0x2000, scoped, tag = 'input window, operand 0, single buffered']
    #allocation3 [shape = 's32[1]{0}', space=sflag, size = 0x4, scoped, tag = 'scoped memory for tpu_custom_call.1']
    #allocation4 [shape = 'u8[8192]{0}', space=vmem, size = 0x2000, scoped, tag = 'input window, operand 1, single buffered']
    #allocation5 [shape = 's32[1]{0}', space=sflag, size = 0x4, scoped, tag = 'scoped memory for tpu_custom_call.1']
    %11 = vsyncpa [#allocation3], 0
    %12 = vsyncpa [#allocation5], 0
    // Predicated region
    $region2: #{tpu_custom_call.1} parent=1 // pred_check
      _
    $region3: #{tpu_custom_call.1} parent=1 // pred_check_branch
      %14 = sbr.rel (0) target = $region5
    $region4: #{tpu_custom_call.1} parent=1 // pred_region
      %s15 = sadd.s32 0, 0
      %s16 = smul.u32 2, %s15
      %s18 = ssub.s32 256, 256
      %19 = vsyncadd [#allocation3], %s18
      %s20 = smul.addr %s16, 128
      %s21 = scalar_lea.hbm %s0, %s20
      %s23 = sshll.u32 [#allocation2], 4
      %s24 = int_to_ptr.vmem [resolvable:$true] %s23
      %26 = dma.hbm_to_vmem [thread:$0]  %s21, 256, %s24, [#allocation3]
    $region5: #{tpu_custom_call.1} parent=1 // pred_fallthru
      _
    // Predicated region
    $region6: #{tpu_custom_call.1} parent=1 // pred_check
      _
    $region7: #{tpu_custom_call.1} parent=1 // pred_check_branch
      %28 = sbr.rel (0) target = $region9
    $region8: #{tpu_custom_call.1} parent=1 // pred_region
      %s29 = sadd.s32 0, 0
      %s30 = smul.u32 2, %s29
      %s32 = ssub.s32 256, 256
      %33 = vsyncadd [#allocation5], %s32
      %s34 = smul.addr %s30, 128
      %s35 = scalar_lea.hbm %s1, %s34
      %s37 = sshll.u32 [#allocation4], 4
      %s38 = int_to_ptr.vmem [resolvable:$true] %s37
      %40 = dma.hbm_to_vmem [thread:$0]  %s35, 256, %s38, [#allocation5]
    $region9: #{tpu_custom_call.1} parent=1 // pred_fallthru
      _
    // Predicated region
    $region10: #{tpu_custom_call.1} parent=1 // pred_check
      _
    $region11: #{tpu_custom_call.1} parent=1 // pred_check_branch
      %42 = sbr.rel (0) target = $region13
    $region12: #{tpu_custom_call.1} parent=1 // pred_region
      %43 = dma.done [#allocation3], 256
    $region13: #{tpu_custom_call.1} parent=1 // pred_fallthru
      _
    // Predicated region
    $region14: #{tpu_custom_call.1} parent=1 // pred_check
      _
    $region15: #{tpu_custom_call.1} parent=1 // pred_check_branch
      %45 = sbr.rel (0) target = $region17
    $region16: #{tpu_custom_call.1} parent=1 // pred_region
      %46 = dma.done [#allocation5], 256
    $region17: #{tpu_custom_call.1} parent=1 // pred_fallthru
      _
    %s47 = sadd.s32 0, 0
    %s48 = smul.u32 2, %s47
    %s49 = sadd.s32 0, 0
    %s50 = smul.u32 2, %s49
    %v51 = vld [vmem:[#allocation2] sm:$0xff]
    %v52 = vld [vmem:[#allocation2 + $0x8] sm:$0xff]
    %v53 = vld [vmem:[#allocation4] sm:$0xff]
    %v54 = vld [vmem:[#allocation4 + $0x8] sm:$0xff]
    %v55 = vmul.f32 %v51, %v53
    %v56 = vmul.f32 %v52, %v54
    %v57 = vand.u32 2147483647, %v51
    %v58 = vand.u32 2147483647, %v52
    %v59 = vsub.f32 0.0, %v57
    %v60 = vsub.f32 0.0, %v58
    %v61 = vmul.f32 %v59, 1.442695
    %v62 = vpow.pop %v61
    %v63 = vmul.f32 %v60, 1.442695
    %v64 = vpow.pop %v63
    %v65 = vadd.f32 %v62, 1.0
    %v66 = vadd.f32 %v64, 1.0
    %v67 = vrcp.pop %v65
    %v68 = vrcp.pop %v66
    %v69 = vmul.f32 %v65, %v67
    %v70 = vmul.f32 %v66, %v68
    %v71 = vsub.f32 2.0, %v69
    %v72 = vsub.f32 2.0, %v70
    %v73 = vmul.f32 %v67, %v71
    %v74 = vmul.f32 %v68, %v72
    %v75 = vlog2.pop %v65
    %v76 = vmul.f32 %v75, 0.6931472
    %v77 = vlog2.pop %v66
    %v78 = vmul.f32 %v77, 0.6931472
    %vm79 = vcmp.ge.f32.partialorder %v51, 0.0
    %vm80 = vcmp.ge.f32.partialorder %v52, 0.0
    %v81 = vmul.f32 %v62, %v73
    %v82 = vmul.f32 %v64, %v74
    %v83 = vsel %vm79, %v73, %v81
    %v84 = vsel %vm80, %v74, %v82
    %v85 = vmax.f32 %v51, 0.0
    %v86 = vmax.f32 %v52, 0.0
    %v87 = vsub.f32 %v85, %v55
    %v88 = vsub.f32 %v86, %v56
    %v89 = vadd.f32 %v87, %v76
    %v90 = vadd.f32 %v88, %v78
    %v91 = vadd.f32 %v83, %v53
    %v92 = vadd.f32 %v84, %v54
    %v93 = vmul.f32 %v83, 2.0
    %v94 = vmul.f32 %v84, 2.0
    %v95 = vmul.f32 %v93, %v53
    %v96 = vmul.f32 %v94, %v54
    %v97 = vsub.f32 %v91, %v95
    %v98 = vsub.f32 %v92, %v96
    %v99 = vmul.f32 %v53, 0.5
    %v100 = vmul.f32 %v54, 0.5
    %v101 = vsub.f32 0.75, %v99
    %v102 = vsub.f32 0.75, %v100
    %v103 = vmul.f32 %v97, %v97
    %v104 = vmul.f32 %v98, %v98
    %v105 = vmul.f32 %v101, %v103
    %v106 = vmul.f32 %v102, %v104
    %v107 = vmul.f32 %v105, %v89
    %v108 = vmul.f32 %v106, %v90
    %v109 = vadd.f32 %v107, %v108
    %110 = vadd.xlane.f32.xlu0 %v109
    %v111 = vpop.xlane.xlu0 %110
    %v112 = vadd.f32 %v51, %v52
    %113 = vadd.xlane.f32.xlu0 %v112
    %v114 = vpop.xlane.xlu0 %113
    %v115 = vadd.f32 %v53, %v54
    %116 = vadd.xlane.f32.xlu0 %v115
    %v117 = vpop.xlane.xlu0 %116
    %v118 = vadd.f32 %v55, %v56
    %119 = vadd.xlane.f32.xlu0 %v118
    %v120 = vpop.xlane.xlu0 %119
    %p121 = scmp.eq.s32.totalorder 0, 0
    // Predicated region
    $region18: #{tpu_custom_call.1} parent=1 // pred_check
      %p122 = pneg %p121
    $region19: #{tpu_custom_call.1} parent=1 // pred_check_branch
      %124 = sbr.rel (%p122) target = $region21
    $region20: #{tpu_custom_call.1} parent=1 // pred_region
      %vm125 = vcmask 7168
      %126 = vst.msk [vmem:[%s2] sm:$0xff] %vm125, %v111
      %127 = vst.msk [vmem:[%s3] sm:$0xff] %vm125, %v114
      %128 = vst.msk [vmem:[%s4] sm:$0xff] %vm125, %v117
      %129 = vst.msk [vmem:[%s5] sm:$0xff] %vm125, %v120
    $region21: #{tpu_custom_call.1} parent=1 // pred_fallthru
      _
    %p130 = scmp.gt.s32.totalorder 0, 0
    // Predicated region
    $region22: #{tpu_custom_call.1} parent=1 // pred_check
      %p131 = pneg %p130
    $region23: #{tpu_custom_call.1} parent=1 // pred_check_branch
      %133 = sbr.rel (%p131) target = $region25
    $region24: #{tpu_custom_call.1} parent=1 // pred_region
      %v134 = vld [vmem:[%s2] sm:$0xff]
      %v135 = vadd.f32 %v134, %v111
      %vm136 = vcmask 7168
      %137 = vst.msk [vmem:[%s2] sm:$0xff] %vm136, %v135
      %v138 = vld [vmem:[%s3] sm:$0xff]
      %v139 = vadd.f32 %v138, %v114
      %140 = vst.msk [vmem:[%s3] sm:$0xff] %vm136, %v139
      %v141 = vld [vmem:[%s4] sm:$0xff]
      %v142 = vadd.f32 %v141, %v117
      %143 = vst.msk [vmem:[%s4] sm:$0xff] %vm136, %v142
      %v144 = vld [vmem:[%s5] sm:$0xff]
      %v145 = vadd.f32 %v144, %v120
      %146 = vst.msk [vmem:[%s5] sm:$0xff] %vm136, %v145
    $region25: #{tpu_custom_call.1} parent=1 // pred_fallthru
      _
    // Predicated region
    $region26: #{tpu_custom_call.1} parent=1 // pred_check
      _
    $region27: #{tpu_custom_call.1} parent=1 // pred_check_branch
      %148 = sbr.rel (0) target = $region29
    $region28: #{tpu_custom_call.1} parent=1 // pred_region
      _
    $region29: #{tpu_custom_call.1} parent=1 // pred_fallthru
      _
    // Predicated region
    $region30: #{tpu_custom_call.1} parent=1 // pred_check
      _
    $region31: #{tpu_custom_call.1} parent=1 // pred_check_branch
      %150 = sbr.rel (0) target = $region33
    $region32: #{tpu_custom_call.1} parent=1 // pred_region
      _
    $region33: #{tpu_custom_call.1} parent=1 // pred_fallthru
      _
    // Predicated region
    $region34: #{tpu_custom_call.1} parent=1 // pred_check
      _
    $region35: #{tpu_custom_call.1} parent=1 // pred_check_branch
      %152 = sbr.rel (0) target = $region37
    $region36: #{tpu_custom_call.1} parent=1 // pred_region
      _
    $region37: #{tpu_custom_call.1} parent=1 // pred_fallthru
      _
    // Predicated region
    $region38: #{tpu_custom_call.1} parent=1 // pred_check
      _
    $region39: #{tpu_custom_call.1} parent=1 // pred_check_branch
      %154 = sbr.rel (0) target = $region41
    $region40: #{tpu_custom_call.1} parent=1 // pred_region
      _
    $region41: #{tpu_custom_call.1} parent=1 // pred_fallthru
      _
    // Predicated region
    $region42: #{tpu_custom_call.1} parent=1 // pred_check
      _
    $region43: #{tpu_custom_call.1} parent=1 // pred_check_branch
      %156 = sbr.rel (0) target = $region45
    $region44: #{tpu_custom_call.1} parent=1 // pred_region
      _
    $region45: #{tpu_custom_call.1} parent=1 // pred_fallthru
      _
    // Predicated region
    $region46: #{tpu_custom_call.1} parent=1 // pred_check
      _
    $region47: #{tpu_custom_call.1} parent=1 // pred_check_branch
      %158 = sbr.rel (0) target = $region49
    $region48: #{tpu_custom_call.1} parent=1 // pred_region
      _
    $region49: #{tpu_custom_call.1} parent=1 // pred_fallthru
      _
    // Predicated region
    $region50: #{tpu_custom_call.1} parent=1 // pred_check
      _
    $region51: #{tpu_custom_call.1} parent=1 // pred_check_branch
      %160 = sbr.rel (0) target = $region53
    $region52: #{tpu_custom_call.1} parent=1 // pred_region
      _
    $region53: #{tpu_custom_call.1} parent=1 // pred_fallthru
      _
    // Predicated region
    $region54: #{tpu_custom_call.1} parent=1 // pred_check
      _
    $region55: #{tpu_custom_call.1} parent=1 // pred_check_branch
      %162 = sbr.rel (0) target = $region57
    $region56: #{tpu_custom_call.1} parent=1 // pred_region
      _
    $region57: #{tpu_custom_call.1} parent=1 // pred_fallthru
      _
    %163 = vsyncpa [#allocation3], 1
    %164 = vsyncpa [#allocation5], 1

</llo_original>
